<compile_context>
chip_gen: v5e
topology: v5e:2x2
jax: 0.10.0
libtpu: 0.0.40
codegen_flags: <defaults>
</compile_context>

<pallas_src>
import math

import numpy as np
import jax
import jax.numpy as jnp
from jax.experimental import pallas as pl
from jax.experimental.pallas import tpu as pltpu


# ----------------------------------------------------------------------------- kernel
def _johnson_kernel(x_ref, lo_ref, hi_ref, sel_ref, out_ref):
    x = x_ref[...]                       # (tb, F) f32, F on lanes (never relaid out)
    lo = lo_ref[...]                     # (C, 1, F)
    hi = hi_ref[...]                     # (C, 1, F)
    C = lo_ref.shape[0]
    tf = sel_ref.shape[1]
    F = x_ref.shape[1]
    n_chunks = -(-F // tf)

    for g in range(n_chunks):                             # static unroll over feature chunks
        a = g * tf
        w = min(tf, F - a)
        xg = x[:, a:a + w]                                # (tb, w) static lane slice
        acc = jnp.zeros((x.shape[0], w * C), jnp.float32)  # lane-dense chunk accumulator
        for c in range(C):                                # static unroll; C = code length
            # exact per-bit interval test, pure VPU, no arithmetic on x
            bit = jnp.logical_and(xg >= lo[c, :, a:a + w],
                                  xg <= hi[c, :, a:a + w]).astype(jnp.float32)  # (tb, w)
            # scatter bit c of every feature onto lane f*C + c via an exact 0/1 MXU matmul
            sel_c = sel_ref[c]                            # (tf, tf*C)
            acc = acc + jnp.dot(bit, sel_c[:w, :w * C],
                                preferred_element_type=jnp.float32)
        out_ref[:, a * C:(a + w) * C] = acc.astype(out_ref.dtype)


# ----------------------------------------------------------------------------- helpers
def _round_up(v, m):
    return -(-v // m) * m


_MAX_CHUNK_LANES = 512


def _chunk_width(F, C):
    """Feature-chunk width for the shared bit-scatter selector (bounds its VMEM size)."""
    if F * C <= max(_MAX_CHUNK_LANES, 128):
        return F                                    # single chunk, exact layout
    step = 128 // math.gcd(C, 128)                  # keep chunk lane width (tf*C) 128-aligned
    return max(step, min(F, (_MAX_CHUNK_LANES // C) // step * step))


def _johnson_tables(edges, C, tf):
    """Per-(code bit, feature) thresholds lo/hi_inc (C,1,F) and the 0/1 scatter selector."""
    F, max_bin = edges.shape

    c = jnp.arange(C)

    def gather(idx, inclusive):
        valid = idx < max_bin
        safe = jnp.clip(idx, 0, max_bin - 1)
        vals = edges[:, safe]                                   # (F, C)
        if inclusive:
            vals = jnp.nextafter(vals, -jnp.inf)                # x < e  <=>  x <= nextafter(e,-inf)
        vals = jnp.where(valid[None, :], vals, jnp.inf)
        return jnp.transpose(vals)[:, None, :].astype(jnp.float32)   # (C, 1, F)

    lo = gather(C - c, inclusive=False)        # count >= C-c+1  <=>  x >= edges[C-c]
    hi = gather(2 * C - c, inclusive=True)     # count <= 2C-c   <=>  x <= nextafter(edges[2C-c],-inf)

    # shared per-chunk bit-scatter selector: sel[c, f', f'*C + c] = 1
    j = jnp.arange(tf * C)
    sel = ((jnp.arange(tf)[None, :, None] == (j // C)[None, None, :]) &
           (jnp.arange(C)[:, None, None] == (j % C)[None, None, :])).astype(jnp.float32)
    return lo, hi, sel                                           # (C,1,F), (C,1,F), (C,tf,tf*C)


def _vmem_params():
    """Generation-aware VMEM working-set budget and scoped-VMEM limit."""
    phys = None
    try:
        phys = getattr(pltpu.get_tpu_info(), "vmem_capacity_bytes", None)
    except Exception:
        phys = None
    if not phys:
        phys = 64 * 1024 * 1024          # conservative default: v7x per-TensorCore VMEM
    phys = int(phys)
    budget = min(max(phys * 3 // 8, 12 * 1024 * 1024), 48 * 1024 * 1024)
    limit = min(max(phys * 3 // 4, 32 * 1024 * 1024), 100 * 1024 * 1024)
    return budget, limit


def _pick_batch_tile(B, F, C, tf, out_bytes, budget_bytes, row_align):
    """Largest batch tile whose double-buffered, lane-padded VMEM footprint fits."""
    fc_pad = _round_up(F * C, 128)
    f_pad = _round_up(F, 128)
    # per batch row: double-buffered output + double-buffered x + f32 chunk accumulator
    per_row = 2 * fc_pad * out_bytes + 2 * f_pad * 4 + _round_up(tf * C, 128) * 4
    resident = (2 * C * _round_up(tf, 8) * _round_up(tf * C, 128) * 4   # selector (x2 buffers)
                + 4 * C * 8 * f_pad * 4)                                # lo/hi (x2 buffers)
    tb = (budget_bytes - resident) // per_row
    tb = max(row_align, min(1024, (tb // row_align) * row_align))
    # keep >= ~4 grid steps so the "parallel" batch axis can shard across TensorCores (v7x)
    tb = min(tb, max(row_align, _round_up(pl.cdiv(B, 4), row_align)))
    return min(tb, _round_up(B, row_align))


# ----------------------------------------------------------------------------- wrapper
def johnson_encoding(x, edges, *, tb=None, out_dtype=jnp.float32, flatten_output=False):
    """Johnson bin encoding.  x: (B, F) f32; edges: (F, max_bin) f32, +inf padded, rows sorted.

    Returns (B, F, C) by default (module semantics), or the lane-dense flat (B, F*C)
    view when flatten_output=True (preferred for fused / reshaping consumers)."""
    x = jnp.asarray(x, jnp.float32)
    edges = jnp.asarray(edges, jnp.float32)
    B, F = x.shape
    Fe, max_bin = edges.shape
    assert Fe == F, "edges must have one row per feature"
    C = (max_bin + 1) // 2
    tf = _chunk_width(F, C)
    lo, hi, sel = _johnson_tables(edges, C, tf)

    out_bytes = int(jnp.dtype(out_dtype).itemsize)
    row_align = 8 * max(1, 4 // out_bytes)        # keep batch tiles sublane-packed for narrow dtypes
    budget, vmem_limit = _vmem_params()
    if tb is None:
        tb = _pick_batch_tile(B, F, C, tf, out_bytes, budget, row_align)
    tb = max(row_align, (int(tb) // row_align) * row_align)
    tb = min(tb, _round_up(B, row_align))

    grid = pl.cdiv(B, tb)   # ragged B: Pallas masks the partial last block (no pad / out[:B] pass)

    out_flat = pl.pallas_call(
        _johnson_kernel,
        out_shape=jax.ShapeDtypeStruct((B, F * C), out_dtype),
        grid=(grid,),
        in_specs=[
            pl.BlockSpec((tb, F), lambda i: (i, 0)),             # x batch tile, native lane layout
            pl.BlockSpec((C, 1, F), lambda i: (0, 0, 0)),        # lo thresholds (resident)
            pl.BlockSpec((C, 1, F), lambda i: (0, 0, 0)),        # hi thresholds (resident)
            pl.BlockSpec((C, tf, tf * C), lambda i: (0, 0, 0)),  # 0/1 bit-scatter selector (resident)
        ],
        out_specs=pl.BlockSpec((tb, F * C), lambda i: (i, 0)),   # lane-dense output slab
        # TODO(synk): sweep pipeline_mode=pl.Buffered(3) on out_specs for v5e writeback overlap.
        compiler_params=pltpu.CompilerParams(
            dimension_semantics=("parallel",),                   # megacore-shard batch tiles
            vmem_limit_bytes=int(vmem_limit),
        ),
    )(x, lo, hi, sel)

    if flatten_output:
        return out_flat           # avoids the XLA relayout cost of the C-minor 3-D view
    return out_flat.reshape(B, F, C)


# ----------------------------------------------------------------------------- reference
def _build_edges_buffer(bins):
    """Replicates _JohnsonEncodingImpl.__init__'s 'edges' buffer (edges[:, :-1])."""
    max_n_edges = max(len(b) for b in bins)
    rows = []
    for b in bins:
        padded = np.full((max_n_edges,), np.inf, dtype=np.float32)
        padded[: len(b)] = b
        rows.append(padded)
    return np.stack(rows, axis=0)[:, :-1]                         # (F, max_bin)


def _reference(x, edges):
    """Pure-numpy mirror of the PyTorch forward (bucketize + temp_code loops)."""
    x = np.asarray(x, np.float32)
    edges = np.asarray(edges, np.float32)
    B, F = x.shape
    max_bin = edges.shape[1]
    num_bits = max_bin + 1 if max_bin % 2 != 0 else max_bin
    bits = num_bits // 2
    out = np.zeros((B, F, bits), np.float32)
    for b in range(B):
        for f in range(F):
            num = int((edges[f] <= x[b, f]).sum()) - 1            # bucketize(right=True) - 1
            for i in range(bits):
                if bits - i - 1 < num <= num_bits - i - 1:
                    out[b, f, i] = 1.0
    return out


# ----------------------------------------------------------------------------- demo
if __name__ == "__main__":
    key = jax.random.PRNGKey(0)
    k1, k2 = jax.random.split(key)

    # Ragged per-feature bin-edge counts. max_n_edges = 17 -> edges buffer (12, 16) -> C = 8.
    n_edges = [17, 17, 9, 5, 13, 17, 3, 17, 11, 7, 17, 15]
    bins = [np.linspace(-1.0, 1.0, n, dtype=np.float32) for n in n_edges]
    edges_np = _build_edges_buffer(bins)                          # (12, 16)
    edges = jnp.asarray(edges_np)

    F = len(bins)
    B = 256
    # np.array(...) makes a writeable host copy (np.asarray of a jax array is read-only).
    x_np = np.array(jax.random.uniform(k1, (B, F), dtype=jnp.float32,
                                       minval=-1.5, maxval=1.5))
    # Exercise exact ties with bin edges (right=True tie-breaking).
    for f in range(F):
        x_np[0, f] = bins[f][min(2, len(bins[f]) - 1)]
        x_np[1, f] = bins[f][0]
    x = jnp.asarray(x_np)

    C = (edges_np.shape[1] + 1) // 2
    ref = _reference(x_np, edges_np)

    out = jax.block_until_ready(johnson_encoding(x, edges))       # auto tb -> 64, grid = 4
    assert out.shape == (B, F, C) and out.dtype == jnp.float32
    np.testing.assert_array_equal(np.asarray(out), ref)

    # bf16 codes are exact (values are 0/1) and halve the HBM-bound output traffic.
    out_bf16 = jax.block_until_ready(johnson_encoding(x, edges, out_dtype=jnp.bfloat16))
    np.testing.assert_array_equal(np.asarray(out_bf16.astype(jnp.float32)), ref)

    # Lane-dense flat output (what a fused downstream consumer should take).
    out_flat = jax.block_until_ready(johnson_encoding(x, edges, flatten_output=True))
    np.testing.assert_array_equal(np.asarray(out_flat).reshape(B, F, C), ref)

    # Ragged batch: partial last block is masked in-kernel; no pad / out[:B] pass in the wrapper.
    B2 = 50
    x2_np = np.array(jax.random.uniform(k2, (B2, F), dtype=jnp.float32,
                                        minval=-1.5, maxval=1.5))
    out2 = jax.block_until_ready(johnson_encoding(jnp.asarray(x2_np), edges))
    np.testing.assert_array_equal(np.asarray(out2), _reference(x2_np, edges_np))

    print("KERNEL_OK")
</pallas_src>

<mosaic_0001>
module attributes {stable_mosaic.version = 11 : i64} {
  func.func @_johnson_kernel(%arg0: i32, %arg1: memref<64x12xf32, #tpu.memory_space<vmem>>, %arg2: memref<8x1x12xf32, #tpu.memory_space<vmem>>, %arg3: memref<8x1x12xf32, #tpu.memory_space<vmem>>, %arg4: memref<8x12x96xf32, #tpu.memory_space<vmem>>, %arg5: memref<64x96xf32, #tpu.memory_space<vmem>>) attributes {dimension_semantics = [#tpu.dimension_semantics<parallel>], iteration_bounds = array<i64: 4>, scalar_prefetch = 0 : i64, scratch_operands = 0 : i64, tpu.core_type = #tpu.core_type<tc>, window_params = [{transform_indices = @transform_0, window_bounds = array<i64: 64, 12>}, {pipeline_mode = #tpu.pipeline_mode<synchronous>, transform_indices = @transform_1, window_bounds = array<i64: 8, 1, 12>}, {pipeline_mode = #tpu.pipeline_mode<synchronous>, transform_indices = @transform_2, window_bounds = array<i64: 8, 1, 12>}, {pipeline_mode = #tpu.pipeline_mode<synchronous>, transform_indices = @transform_3, window_bounds = array<i64: 8, 12, 96>}, {transform_indices = @transform_4, window_bounds = array<i64: 64, 96>}]} {
    %c0 = arith.constant 0 : index
    %c0_0 = arith.constant 0 : index
    %0 = vector.load %arg1[%c0, %c0_0] : memref<64x12xf32, #tpu.memory_space<vmem>>, vector<64x12xf32>
    %c0_1 = arith.constant 0 : index
    %c0_2 = arith.constant 0 : index
    %c0_3 = arith.constant 0 : index
    %1 = vector.load %arg2[%c0_1, %c0_2, %c0_3] : memref<8x1x12xf32, #tpu.memory_space<vmem>>, vector<8x1x12xf32>
    %c0_4 = arith.constant 0 : index
    %c0_5 = arith.constant 0 : index
    %c0_6 = arith.constant 0 : index
    %2 = vector.load %arg3[%c0_4, %c0_5, %c0_6] : memref<8x1x12xf32, #tpu.memory_space<vmem>>, vector<8x1x12xf32>
    %cst = arith.constant 0.000000e+00 : f32
    %3 = vector.broadcast %cst : f32 to vector<64x96xf32>
    %4 = vector.extract_strided_slice %1 {offsets = [0, 0, 0], sizes = [1, 1, 12], strides = [1, 1, 1]} : vector<8x1x12xf32> to vector<1x1x12xf32>
    %5 = vector.shape_cast %4 : vector<1x1x12xf32> to vector<1x12xf32>
    %6 = vector.broadcast %5 : vector<1x12xf32> to vector<64x12xf32>
    %7 = arith.cmpf oge, %0, %6 : vector<64x12xf32>
    %8 = vector.extract_strided_slice %2 {offsets = [0, 0, 0], sizes = [1, 1, 12], strides = [1, 1, 1]} : vector<8x1x12xf32> to vector<1x1x12xf32>
    %9 = vector.shape_cast %8 : vector<1x1x12xf32> to vector<1x12xf32>
    %10 = vector.broadcast %9 : vector<1x12xf32> to vector<64x12xf32>
    %11 = arith.cmpf ole, %0, %10 : vector<64x12xf32>
    %12 = arith.andi %7, %11 : vector<64x12xi1>
    %13 = arith.extui %12 : vector<64x12xi1> to vector<64x12xi32>
    %14 = arith.sitofp %13 : vector<64x12xi32> to vector<64x12xf32>
    %c0_7 = arith.constant 0 : index
    %c0_8 = arith.constant 0 : index
    %c0_9 = arith.constant 0 : index
    %15 = vector.load %arg4[%c0_7, %c0_8, %c0_9] : memref<8x12x96xf32, #tpu.memory_space<vmem>>, vector<1x12x96xf32>
    %16 = vector.shape_cast %15 : vector<1x12x96xf32> to vector<12x96xf32>
    %cst_10 = arith.constant dense<0.000000e+00> : vector<64x96xf32>
    %17 = tpu.matmul %14, %16, %cst_10 {dimension_numbers = #tpu.dot_dimension_numbers<[1], [0], [0], [1], [0, 0, 1, 1], [], []>} : vector<64x12xf32>, vector<12x96xf32>, vector<64x96xf32> -> vector<64x96xf32>
    %18 = arith.addf %3, %17 : vector<64x96xf32>
    %19 = vector.extract_strided_slice %1 {offsets = [1, 0, 0], sizes = [1, 1, 12], strides = [1, 1, 1]} : vector<8x1x12xf32> to vector<1x1x12xf32>
    %20 = vector.shape_cast %19 : vector<1x1x12xf32> to vector<1x12xf32>
    %21 = vector.broadcast %20 : vector<1x12xf32> to vector<64x12xf32>
    %22 = arith.cmpf oge, %0, %21 : vector<64x12xf32>
    %23 = vector.extract_strided_slice %2 {offsets = [1, 0, 0], sizes = [1, 1, 12], strides = [1, 1, 1]} : vector<8x1x12xf32> to vector<1x1x12xf32>
    %24 = vector.shape_cast %23 : vector<1x1x12xf32> to vector<1x12xf32>
    %25 = vector.broadcast %24 : vector<1x12xf32> to vector<64x12xf32>
    %26 = arith.cmpf ole, %0, %25 : vector<64x12xf32>
    %27 = arith.andi %22, %26 : vector<64x12xi1>
    %28 = arith.extui %27 : vector<64x12xi1> to vector<64x12xi32>
    %29 = arith.sitofp %28 : vector<64x12xi32> to vector<64x12xf32>
    %c1 = arith.constant 1 : index
    %c0_11 = arith.constant 0 : index
    %c0_12 = arith.constant 0 : index
    %30 = vector.load %arg4[%c1, %c0_11, %c0_12] : memref<8x12x96xf32, #tpu.memory_space<vmem>>, vector<1x12x96xf32>
    %31 = vector.shape_cast %30 : vector<1x12x96xf32> to vector<12x96xf32>
    %cst_13 = arith.constant dense<0.000000e+00> : vector<64x96xf32>
    %32 = tpu.matmul %29, %31, %cst_13 {dimension_numbers = #tpu.dot_dimension_numbers<[1], [0], [0], [1], [0, 0, 1, 1], [], []>} : vector<64x12xf32>, vector<12x96xf32>, vector<64x96xf32> -> vector<64x96xf32>
    %33 = arith.addf %18, %32 : vector<64x96xf32>
    %34 = vector.extract_strided_slice %1 {offsets = [2, 0, 0], sizes = [1, 1, 12], strides = [1, 1, 1]} : vector<8x1x12xf32> to vector<1x1x12xf32>
    %35 = vector.shape_cast %34 : vector<1x1x12xf32> to vector<1x12xf32>
    %36 = vector.broadcast %35 : vector<1x12xf32> to vector<64x12xf32>
    %37 = arith.cmpf oge, %0, %36 : vector<64x12xf32>
    %38 = vector.extract_strided_slice %2 {offsets = [2, 0, 0], sizes = [1, 1, 12], strides = [1, 1, 1]} : vector<8x1x12xf32> to vector<1x1x12xf32>
    %39 = vector.shape_cast %38 : vector<1x1x12xf32> to vector<1x12xf32>
    %40 = vector.broadcast %39 : vector<1x12xf32> to vector<64x12xf32>
    %41 = arith.cmpf ole, %0, %40 : vector<64x12xf32>
    %42 = arith.andi %37, %41 : vector<64x12xi1>
    %43 = arith.extui %42 : vector<64x12xi1> to vector<64x12xi32>
    %44 = arith.sitofp %43 : vector<64x12xi32> to vector<64x12xf32>
    %c2 = arith.constant 2 : index
    %c0_14 = arith.constant 0 : index
    %c0_15 = arith.constant 0 : index
    %45 = vector.load %arg4[%c2, %c0_14, %c0_15] : memref<8x12x96xf32, #tpu.memory_space<vmem>>, vector<1x12x96xf32>
    %46 = vector.shape_cast %45 : vector<1x12x96xf32> to vector<12x96xf32>
    %cst_16 = arith.constant dense<0.000000e+00> : vector<64x96xf32>
    %47 = tpu.matmul %44, %46, %cst_16 {dimension_numbers = #tpu.dot_dimension_numbers<[1], [0], [0], [1], [0, 0, 1, 1], [], []>} : vector<64x12xf32>, vector<12x96xf32>, vector<64x96xf32> -> vector<64x96xf32>
    %48 = arith.addf %33, %47 : vector<64x96xf32>
    %49 = vector.extract_strided_slice %1 {offsets = [3, 0, 0], sizes = [1, 1, 12], strides = [1, 1, 1]} : vector<8x1x12xf32> to vector<1x1x12xf32>
    %50 = vector.shape_cast %49 : vector<1x1x12xf32> to vector<1x12xf32>
    %51 = vector.broadcast %50 : vector<1x12xf32> to vector<64x12xf32>
    %52 = arith.cmpf oge, %0, %51 : vector<64x12xf32>
    %53 = vector.extract_strided_slice %2 {offsets = [3, 0, 0], sizes = [1, 1, 12], strides = [1, 1, 1]} : vector<8x1x12xf32> to vector<1x1x12xf32>
    %54 = vector.shape_cast %53 : vector<1x1x12xf32> to vector<1x12xf32>
    %55 = vector.broadcast %54 : vector<1x12xf32> to vector<64x12xf32>
    %56 = arith.cmpf ole, %0, %55 : vector<64x12xf32>
    %57 = arith.andi %52, %56 : vector<64x12xi1>
    %58 = arith.extui %57 : vector<64x12xi1> to vector<64x12xi32>
    %59 = arith.sitofp %58 : vector<64x12xi32> to vector<64x12xf32>
    %c3 = arith.constant 3 : index
    %c0_17 = arith.constant 0 : index
    %c0_18 = arith.constant 0 : index
    %60 = vector.load %arg4[%c3, %c0_17, %c0_18] : memref<8x12x96xf32, #tpu.memory_space<vmem>>, vector<1x12x96xf32>
    %61 = vector.shape_cast %60 : vector<1x12x96xf32> to vector<12x96xf32>
    %cst_19 = arith.constant dense<0.000000e+00> : vector<64x96xf32>
    %62 = tpu.matmul %59, %61, %cst_19 {dimension_numbers = #tpu.dot_dimension_numbers<[1], [0], [0], [1], [0, 0, 1, 1], [], []>} : vector<64x12xf32>, vector<12x96xf32>, vector<64x96xf32> -> vector<64x96xf32>
    %63 = arith.addf %48, %62 : vector<64x96xf32>
    %64 = vector.extract_strided_slice %1 {offsets = [4, 0, 0], sizes = [1, 1, 12], strides = [1, 1, 1]} : vector<8x1x12xf32> to vector<1x1x12xf32>
    %65 = vector.shape_cast %64 : vector<1x1x12xf32> to vector<1x12xf32>
    %66 = vector.broadcast %65 : vector<1x12xf32> to vector<64x12xf32>
    %67 = arith.cmpf oge, %0, %66 : vector<64x12xf32>
    %68 = vector.extract_strided_slice %2 {offsets = [4, 0, 0], sizes = [1, 1, 12], strides = [1, 1, 1]} : vector<8x1x12xf32> to vector<1x1x12xf32>
    %69 = vector.shape_cast %68 : vector<1x1x12xf32> to vector<1x12xf32>
    %70 = vector.broadcast %69 : vector<1x12xf32> to vector<64x12xf32>
    %71 = arith.cmpf ole, %0, %70 : vector<64x12xf32>
    %72 = arith.andi %67, %71 : vector<64x12xi1>
    %73 = arith.extui %72 : vector<64x12xi1> to vector<64x12xi32>
    %74 = arith.sitofp %73 : vector<64x12xi32> to vector<64x12xf32>
    %c4 = arith.constant 4 : index
    %c0_20 = arith.constant 0 : index
    %c0_21 = arith.constant 0 : index
    %75 = vector.load %arg4[%c4, %c0_20, %c0_21] : memref<8x12x96xf32, #tpu.memory_space<vmem>>, vector<1x12x96xf32>
    %76 = vector.shape_cast %75 : vector<1x12x96xf32> to vector<12x96xf32>
    %cst_22 = arith.constant dense<0.000000e+00> : vector<64x96xf32>
    %77 = tpu.matmul %74, %76, %cst_22 {dimension_numbers = #tpu.dot_dimension_numbers<[1], [0], [0], [1], [0, 0, 1, 1], [], []>} : vector<64x12xf32>, vector<12x96xf32>, vector<64x96xf32> -> vector<64x96xf32>
    %78 = arith.addf %63, %77 : vector<64x96xf32>
    %79 = vector.extract_strided_slice %1 {offsets = [5, 0, 0], sizes = [1, 1, 12], strides = [1, 1, 1]} : vector<8x1x12xf32> to vector<1x1x12xf32>
    %80 = vector.shape_cast %79 : vector<1x1x12xf32> to vector<1x12xf32>
    %81 = vector.broadcast %80 : vector<1x12xf32> to vector<64x12xf32>
    %82 = arith.cmpf oge, %0, %81 : vector<64x12xf32>
    %83 = vector.extract_strided_slice %2 {offsets = [5, 0, 0], sizes = [1, 1, 12], strides = [1, 1, 1]} : vector<8x1x12xf32> to vector<1x1x12xf32>
    %84 = vector.shape_cast %83 : vector<1x1x12xf32> to vector<1x12xf32>
    %85 = vector.broadcast %84 : vector<1x12xf32> to vector<64x12xf32>
    %86 = arith.cmpf ole, %0, %85 : vector<64x12xf32>
    %87 = arith.andi %82, %86 : vector<64x12xi1>
    %88 = arith.extui %87 : vector<64x12xi1> to vector<64x12xi32>
    %89 = arith.sitofp %88 : vector<64x12xi32> to vector<64x12xf32>
    %c5 = arith.constant 5 : index
    %c0_23 = arith.constant 0 : index
    %c0_24 = arith.constant 0 : index
    %90 = vector.load %arg4[%c5, %c0_23, %c0_24] : memref<8x12x96xf32, #tpu.memory_space<vmem>>, vector<1x12x96xf32>
    %91 = vector.shape_cast %90 : vector<1x12x96xf32> to vector<12x96xf32>
    %cst_25 = arith.constant dense<0.000000e+00> : vector<64x96xf32>
    %92 = tpu.matmul %89, %91, %cst_25 {dimension_numbers = #tpu.dot_dimension_numbers<[1], [0], [0], [1], [0, 0, 1, 1], [], []>} : vector<64x12xf32>, vector<12x96xf32>, vector<64x96xf32> -> vector<64x96xf32>
    %93 = arith.addf %78, %92 : vector<64x96xf32>
    %94 = vector.extract_strided_slice %1 {offsets = [6, 0, 0], sizes = [1, 1, 12], strides = [1, 1, 1]} : vector<8x1x12xf32> to vector<1x1x12xf32>
    %95 = vector.shape_cast %94 : vector<1x1x12xf32> to vector<1x12xf32>
    %96 = vector.broadcast %95 : vector<1x12xf32> to vector<64x12xf32>
    %97 = arith.cmpf oge, %0, %96 : vector<64x12xf32>
    %98 = vector.extract_strided_slice %2 {offsets = [6, 0, 0], sizes = [1, 1, 12], strides = [1, 1, 1]} : vector<8x1x12xf32> to vector<1x1x12xf32>
    %99 = vector.shape_cast %98 : vector<1x1x12xf32> to vector<1x12xf32>
    %100 = vector.broadcast %99 : vector<1x12xf32> to vector<64x12xf32>
    %101 = arith.cmpf ole, %0, %100 : vector<64x12xf32>
    %102 = arith.andi %97, %101 : vector<64x12xi1>
    %103 = arith.extui %102 : vector<64x12xi1> to vector<64x12xi32>
    %104 = arith.sitofp %103 : vector<64x12xi32> to vector<64x12xf32>
    %c6 = arith.constant 6 : index
    %c0_26 = arith.constant 0 : index
    %c0_27 = arith.constant 0 : index
    %105 = vector.load %arg4[%c6, %c0_26, %c0_27] : memref<8x12x96xf32, #tpu.memory_space<vmem>>, vector<1x12x96xf32>
    %106 = vector.shape_cast %105 : vector<1x12x96xf32> to vector<12x96xf32>
    %cst_28 = arith.constant dense<0.000000e+00> : vector<64x96xf32>
    %107 = tpu.matmul %104, %106, %cst_28 {dimension_numbers = #tpu.dot_dimension_numbers<[1], [0], [0], [1], [0, 0, 1, 1], [], []>} : vector<64x12xf32>, vector<12x96xf32>, vector<64x96xf32> -> vector<64x96xf32>
    %108 = arith.addf %93, %107 : vector<64x96xf32>
    %109 = vector.extract_strided_slice %1 {offsets = [7, 0, 0], sizes = [1, 1, 12], strides = [1, 1, 1]} : vector<8x1x12xf32> to vector<1x1x12xf32>
    %110 = vector.shape_cast %109 : vector<1x1x12xf32> to vector<1x12xf32>
    %111 = vector.broadcast %110 : vector<1x12xf32> to vector<64x12xf32>
    %112 = arith.cmpf oge, %0, %111 : vector<64x12xf32>
    %113 = vector.extract_strided_slice %2 {offsets = [7, 0, 0], sizes = [1, 1, 12], strides = [1, 1, 1]} : vector<8x1x12xf32> to vector<1x1x12xf32>
    %114 = vector.shape_cast %113 : vector<1x1x12xf32> to vector<1x12xf32>
    %115 = vector.broadcast %114 : vector<1x12xf32> to vector<64x12xf32>
    %116 = arith.cmpf ole, %0, %115 : vector<64x12xf32>
    %117 = arith.andi %112, %116 : vector<64x12xi1>
    %118 = arith.extui %117 : vector<64x12xi1> to vector<64x12xi32>
    %119 = arith.sitofp %118 : vector<64x12xi32> to vector<64x12xf32>
    %c7 = arith.constant 7 : index
    %c0_29 = arith.constant 0 : index
    %c0_30 = arith.constant 0 : index
    %120 = vector.load %arg4[%c7, %c0_29, %c0_30] : memref<8x12x96xf32, #tpu.memory_space<vmem>>, vector<1x12x96xf32>
    %121 = vector.shape_cast %120 : vector<1x12x96xf32> to vector<12x96xf32>
    %cst_31 = arith.constant dense<0.000000e+00> : vector<64x96xf32>
    %122 = tpu.matmul %119, %121, %cst_31 {dimension_numbers = #tpu.dot_dimension_numbers<[1], [0], [0], [1], [0, 0, 1, 1], [], []>} : vector<64x12xf32>, vector<12x96xf32>, vector<64x96xf32> -> vector<64x96xf32>
    %123 = arith.addf %108, %122 : vector<64x96xf32>
    %c0_32 = arith.constant 0 : index
    %c0_33 = arith.constant 0 : index
    %124 = vector.load %arg5[%c0_32, %c0_33] : memref<64x96xf32, #tpu.memory_space<vmem>>, vector<64x96xf32>
    tpu.vector_store %arg5[%c0_32, %c0_33], %123 {strides = array<i32>} : memref<64x96xf32, #tpu.memory_space<vmem>>, vector<64x96xf32>,
    return
  }
  func.func @transform_0(%arg0: i32) -> (i32, i32) {
    %c0_i32 = arith.constant 0 : i32
    %c0_i32_0 = arith.constant 0 : i32
    return %arg0, %c0_i32 : i32, i32
  }
  func.func @transform_1(%arg0: i32) -> (i32, i32, i32) {
    %c0_i32 = arith.constant 0 : i32
    %c0_i32_0 = arith.constant 0 : i32
    %c0_i32_1 = arith.constant 0 : i32
    %c0_i32_2 = arith.constant 0 : i32
    return %c0_i32, %c0_i32_0, %c0_i32_1 : i32, i32, i32
  }
  func.func @transform_2(%arg0: i32) -> (i32, i32, i32) {
    %c0_i32 = arith.constant 0 : i32
    %c0_i32_0 = arith.constant 0 : i32
    %c0_i32_1 = arith.constant 0 : i32
    %c0_i32_2 = arith.constant 0 : i32
    return %c0_i32, %c0_i32_0, %c0_i32_1 : i32, i32, i32
  }
  func.func @transform_3(%arg0: i32) -> (i32, i32, i32) {
    %c0_i32 = arith.constant 0 : i32
    %c0_i32_0 = arith.constant 0 : i32
    %c0_i32_1 = arith.constant 0 : i32
    %c0_i32_2 = arith.constant 0 : i32
    return %c0_i32, %c0_i32_0, %c0_i32_1 : i32, i32, i32
  }
  func.func @transform_4(%arg0: i32) -> (i32, i32) {
    %c0_i32 = arith.constant 0 : i32
    %c0_i32_0 = arith.constant 0 : i32
    return %arg0, %c0_i32 : i32, i32
  }
}

</mosaic_0001>

<llo_original>
// kernel: tpu_custom_call.1
$region0: #{tpu_custom_call.1}
  #allocation0 [shape = 'u32[]', space=smem, size = 0x4, offset = 0x4, fixed_abs, tag = 'smem constant byte address 0x4 - core index']
  #allocation1 [shape = 'u32[72,128]{1,0:T(1,128)}', space=vmem, size = 0x9000, scoped, tag = 'internal scratch']
  %s0 = inlined_call_operand.vmem [shape: f32[256,12], index: 0, kind: input, shape index: {}]
  %s1 = inlined_call_operand.vmem [shape: f32[8,1,12], index: 1, kind: input, shape index: {}]
  %s2 = inlined_call_operand.vmem [shape: f32[8,1,12], index: 2, kind: input, shape index: {}]
  %s3 = inlined_call_operand.vmem [shape: f32[8,12,96], index: 3, kind: input, shape index: {}]
  %s4 = inlined_call_operand.vmem [shape: f32[256,96], index: 4, kind: output, shape index: {}]
  %s5 = sld [smem:[#allocation0]]
  $region49: #{tpu_custom_call.1} parent=0
    _
  %s7 = ssub.s32 1, %s5
  %s8 = scalar_select 0, %s7, %s5
  loop: start=0, step=1, limit=6
  $region2: #{tpu_custom_call.1} parent=0 // loop_pre_header
    _
  $region3: #{tpu_custom_call.1} parent=0 // loop_header
    %s10 = sphi 0, %s14
    %p11 = scmp.ge.s32.totalorder %s10, 6
    %s20 = sphi 0, %s22
    %s23 = sphi 0, %s20
    %s24 = sphi 0, %s23
    %s40 = sphi 0, %s24
    %s44 = sphi 0, %s44
    %s46 = sphi 0, %s44
    %s47 = sphi 0, %s46
    %s61 = sphi 0, %s47
    %s65 = sphi 0, %s65
    %s67 = sphi 0, %s65
    %s68 = sphi 0, %s67
    %s82 = sphi 0, %s68
    %s86 = sphi 0, %s86
    %s88 = sphi 0, %s86
    %s89 = sphi 0, %s88
    %s103 = sphi 0, %s89
    %s109 = sphi 0, %s111
    %s112 = sphi 0, %s109
    %s113 = sphi 0, %s112
    %s129 = sphi 0, %s113
  $region4: #{tpu_custom_call.1} parent=0 // loop_header_branch
    %13 = sbr.rel (%p11) target = $region8
  $region5: #{tpu_custom_call.1} parent=0 // loop_body
    %s15 = ssub.s32 %s10, 1
    %s16 = ssub.s32 %s10, 2
    %s17 = sadd.s32 %s10, 1
    %s18 = ssub.s32 %s10, %s17
    %p19 = scmp.eq.s32.totalorder %s18, 0
    %s21 = sadd.s32 %s20, 1
    %s22 = scalar_select %p19, %s20, %s21
    %p25 = pneg %p19
    %p26 = scmp.eq.s32.totalorder %s10, 3
    %p27 = por %p25, %p26
    %p28 = scmp.ne.s32.totalorder %s20, %s23
    %p29 = scmp.eq.s32.totalorder %s10, 0
    %p30 = por %p28, %p29
    %p31 = scmp.ne.s32.totalorder %s20, %s23
    %p32 = scmp.eq.s32.totalorder %s15, 3
    %p33 = por %p31, %p32
    %p34 = scmp.ne.s32.totalorder %s23, %s24
    %p35 = scmp.eq.s32.totalorder %s15, 0
    %p36 = por %p34, %p35
    %p37 = scmp.ne.s32.totalorder %s23, %s24
    %p38 = scmp.eq.s32.totalorder %s16, 3
    %p39 = por %p37, %p38
    %p41 = scmp.ne.s32.totalorder %s24, %s40
    %p42 = scmp.eq.s32.totalorder %s16, 0
    %p43 = por %p41, %p42
    %s45 = sadd.s32 %s44, 1
    %p48 = scmp.eq.s32.totalorder %s10, 3
    %p49 = scmp.ne.s32.totalorder %s44, %s46
    %p50 = scmp.eq.s32.totalorder %s10, 0
    %p51 = por %p49, %p50
    %p52 = scmp.ne.s32.totalorder %s44, %s46
    %p53 = scmp.eq.s32.totalorder %s15, 3
    %p54 = por %p52, %p53
    %p55 = scmp.ne.s32.totalorder %s46, %s47
    %p56 = scmp.eq.s32.totalorder %s15, 0
    %p57 = por %p55, %p56
    %p58 = scmp.ne.s32.totalorder %s46, %s47
    %p59 = scmp.eq.s32.totalorder %s16, 3
    %p60 = por %p58, %p59
    %p62 = scmp.ne.s32.totalorder %s47, %s61
    %p63 = scmp.eq.s32.totalorder %s16, 0
    %p64 = por %p62, %p63
    %s66 = sadd.s32 %s65, 1
    %p69 = scmp.eq.s32.totalorder %s10, 3
    %p70 = scmp.ne.s32.totalorder %s65, %s67
    %p71 = scmp.eq.s32.totalorder %s10, 0
    %p72 = por %p70, %p71
    %p73 = scmp.ne.s32.totalorder %s65, %s67
    %p74 = scmp.eq.s32.totalorder %s15, 3
    %p75 = por %p73, %p74
    %p76 = scmp.ne.s32.totalorder %s67, %s68
    %p77 = scmp.eq.s32.totalorder %s15, 0
    %p78 = por %p76, %p77
    %p79 = scmp.ne.s32.totalorder %s67, %s68
    %p80 = scmp.eq.s32.totalorder %s16, 3
    %p81 = por %p79, %p80
    %p83 = scmp.ne.s32.totalorder %s68, %s82
    %p84 = scmp.eq.s32.totalorder %s16, 0
    %p85 = por %p83, %p84
    %s87 = sadd.s32 %s86, 1
    %p90 = scmp.eq.s32.totalorder %s10, 3
    %p91 = scmp.ne.s32.totalorder %s86, %s88
    %p92 = scmp.eq.s32.totalorder %s10, 0
    %p93 = por %p91, %p92
    %p94 = scmp.ne.s32.totalorder %s86, %s88
    %p95 = scmp.eq.s32.totalorder %s15, 3
    %p96 = por %p94, %p95
    %p97 = scmp.ne.s32.totalorder %s88, %s89
    %p98 = scmp.eq.s32.totalorder %s15, 0
    %p99 = por %p97, %p98
    %p100 = scmp.ne.s32.totalorder %s88, %s89
    %p101 = scmp.eq.s32.totalorder %s16, 3
    %p102 = por %p100, %p101
    %p104 = scmp.ne.s32.totalorder %s89, %s103
    %p105 = scmp.eq.s32.totalorder %s16, 0
    %p106 = por %p104, %p105
    %s107 = ssub.s32 %s10, %s17
    %p108 = scmp.eq.s32.totalorder %s107, 0
    %s110 = sadd.s32 %s109, 1
    %s111 = scalar_select %p108, %s109, %s110
    %p114 = pneg %p108
    %p115 = scmp.eq.s32.totalorder %s10, 3
    %p116 = por %p114, %p115
    %p117 = scmp.ne.s32.totalorder %s109, %s112
    %p118 = scmp.eq.s32.totalorder %s10, 0
    %p119 = por %p117, %p118
    %p120 = scmp.ne.s32.totalorder %s109, %s112
    %p121 = scmp.eq.s32.totalorder %s15, 3
    %p122 = por %p120, %p121
    %p123 = scmp.ne.s32.totalorder %s112, %s113
    %p124 = scmp.eq.s32.totalorder %s15, 0
    %p125 = por %p123, %p124
    %p126 = scmp.ne.s32.totalorder %s112, %s113
    %p127 = scmp.eq.s32.totalorder %s16, 3
    %p128 = por %p126, %p127
    %p130 = scmp.ne.s32.totalorder %s113, %s129
    %p131 = scmp.eq.s32.totalorder %s16, 0
    %p132 = por %p130, %p131
    %p133 = scmp.le.s32.totalorder 1, %s10
    %p134 = scmp.lt.s32.totalorder %s10, 5
    %p135 = pnand %p133, %p134
    %p136 = pneg %p135
    // Predicated region
    $region9: #{tpu_custom_call.1} parent=5 // pred_check
      _
    $region10: #{tpu_custom_call.1} parent=5 // pred_check_branch
      %138 = sbr.rel (%p135) target = $region12
    $region11: #{tpu_custom_call.1} parent=5 // pred_region
      %s139 = ssub.s32 %s10, 1
      // Predicated region
      $region13: #{tpu_custom_call.1} parent=11 // pred_check
        %p140 = pneg %p57
      $region14: #{tpu_custom_call.1} parent=11 // pred_check_branch
        %142 = sbr.rel (%p140) target = $region16
      $region15: #{tpu_custom_call.1} parent=11 // pred_region
        _
      $region16: #{tpu_custom_call.1} parent=11 // pred_fallthru
        _
      // Predicated region
      $region17: #{tpu_custom_call.1} parent=11 // pred_check
        %p143 = pneg %p78
      $region18: #{tpu_custom_call.1} parent=11 // pred_check_branch
        %145 = sbr.rel (%p143) target = $region20
      $region19: #{tpu_custom_call.1} parent=11 // pred_region
        _
      $region20: #{tpu_custom_call.1} parent=11 // pred_fallthru
        _
      // Predicated region
      $region21: #{tpu_custom_call.1} parent=11 // pred_check
        %p146 = pneg %p99
      $region22: #{tpu_custom_call.1} parent=11 // pred_check_branch
        %148 = sbr.rel (%p146) target = $region24
      $region23: #{tpu_custom_call.1} parent=11 // pred_region
        _
      $region24: #{tpu_custom_call.1} parent=11 // pred_fallthru
        _
    $region12: #{tpu_custom_call.1} parent=5 // pred_fallthru
      _
    %p149 = scmp.lt.s32.totalorder %s10, 4
    // Predicated region
    $region25: #{tpu_custom_call.1} parent=5 // pred_check
      %p150 = pneg %p149
    $region26: #{tpu_custom_call.1} parent=5 // pred_check_branch
      %152 = sbr.rel (%p150) target = $region28
    $region27: #{tpu_custom_call.1} parent=5 // pred_region
      // Predicated region
      $region29: #{tpu_custom_call.1} parent=27 // pred_check
        %p153 = pneg %p30
      $region30: #{tpu_custom_call.1} parent=27 // pred_check_branch
        %155 = sbr.rel (%p153) target = $region32
      $region31: #{tpu_custom_call.1} parent=27 // pred_region
        %s156 = smul.u32 8, %s10
        %p157 = scmp.lt.s32.totalorder %s156, 31
        %s158 = scalar_select %p157, %s156, 31
        %s159 = smul.addr %s158, 8
        %s160 = scalar_lea.vmem %s0, %s159
        %s161 = smul.u32 8, %s10
      $region32: #{tpu_custom_call.1} parent=27 // pred_fallthru
        _
    $region28: #{tpu_custom_call.1} parent=5 // pred_fallthru
      _
    %p162 = scmp.le.s32.totalorder 1, %s10
    %p163 = scmp.lt.s32.totalorder %s10, 5
    %p164 = pnand %p162, %p163
    %p165 = pneg %p164
    // Predicated region
    $region33: #{tpu_custom_call.1} parent=5 // pred_check
      _
    $region34: #{tpu_custom_call.1} parent=5 // pred_check_branch
      %167 = sbr.rel (%p164) target = $region36
    $region35: #{tpu_custom_call.1} parent=5 // pred_region
      %s168 = ssub.s32 %s10, 1
      %s169 = smul.u32 8, %s15
      %p170 = scmp.lt.s32.totalorder %s169, 31
      %s171 = scalar_select %p170, %s169, 31
      %s172 = smul.addr %s171, 8
      %s173 = scalar_lea.vmem %s0, %s172
      %p174 = pneg %p36
      %p175 = pneg %p33
      %p176 = pneg %p57
      %p177 = pneg %p54
      %p178 = pneg %p78
      %p179 = pneg %p75
      %p180 = pneg %p99
      %p181 = pneg %p96
      %p182 = pneg %p125
      %p183 = pneg %p122
      %s184 = smul.u32 8, %s15
      %p185 = scmp.lt.s32.totalorder %s184, 31
      %s186 = scalar_select %p185, %s184, 31
      %s187 = smul.addr %s186, 8
      %s188 = scalar_lea.vmem %s4, %s187
      %s189 = smul.u32 8, %s15
      %p190 = scmp.lt.s32.totalorder %s189, 31
      %s191 = scalar_select %p190, %s189, 31
      %s192 = smul.addr %s191, 8
      %s193 = scalar_lea.vmem %s0, %s192
      %s194 = smul.u32 8, %s15
      %s195 = smul.u32 8, %s15
      %p196 = scmp.lt.s32.totalorder %s195, 31
      %s197 = scalar_select %p196, %s195, 31
      %s198 = smul.addr %s197, 8
      %s199 = scalar_lea.vmem %s4, %s198
      %s200 = smul.u32 8, %s15
      %v201 = vld [vmem:[%s193] sm:$0xff]
      %v202 = vld [vmem:[%s193 + $0x8] sm:$0xff]
      %v203 = vld [vmem:[%s193 + $0x10] sm:$0xff]
      %v204 = vld [vmem:[%s193 + $0x18] sm:$0xff]
      %v205 = vld [vmem:[%s193 + $0x20] sm:$0xff]
      %v206 = vld [vmem:[%s193 + $0x28] sm:$0xff]
      %v207 = vld [vmem:[%s193 + $0x30] sm:$0xff]
      %v208 = vld [vmem:[%s193 + $0x38] sm:$0xff]
      %v209 = vld [vmem:[%s1] sm:$0x1]
      %v210 = vld [vmem:[%s1 + $0x1] sm:$0x1]
      %v211 = vld [vmem:[%s1 + $0x2] sm:$0x1]
      %v212 = vld [vmem:[%s1 + $0x3] sm:$0x1]
      %v213 = vld [vmem:[%s1 + $0x4] sm:$0x1]
      %v214 = vld [vmem:[%s1 + $0x5] sm:$0x1]
      %v215 = vld [vmem:[%s1 + $0x6] sm:$0x1]
      %v216 = vld [vmem:[%s1 + $0x7] sm:$0x1]
      %v217 = vld [vmem:[%s2] sm:$0x1]
      %v218 = vld [vmem:[%s2 + $0x1] sm:$0x1]
      %v219 = vld [vmem:[%s2 + $0x2] sm:$0x1]
      %v220 = vld [vmem:[%s2 + $0x3] sm:$0x1]
      %v221 = vld [vmem:[%s2 + $0x4] sm:$0x1]
      %v222 = vld [vmem:[%s2 + $0x5] sm:$0x1]
      %v223 = vld [vmem:[%s2 + $0x6] sm:$0x1]
      %v224 = vld [vmem:[%s2 + $0x7] sm:$0x1]
      %v226 = vperm.slane %v209, 0
      %vm228 = vcmp.ge.f32.partialorder %v201, %v226
      %vm229 = vcmp.ge.f32.partialorder %v202, %v226
      %vm230 = vcmp.ge.f32.partialorder %v203, %v226
      %vm231 = vcmp.ge.f32.partialorder %v204, %v226
      %vm232 = vcmp.ge.f32.partialorder %v205, %v226
      %vm233 = vcmp.ge.f32.partialorder %v206, %v226
      %vm234 = vcmp.ge.f32.partialorder %v207, %v226
      %vm235 = vcmp.ge.f32.partialorder %v208, %v226
      %v237 = vperm.slane %v217, 0
      %vm239 = vcmp.le.f32.partialorder %v201, %v237
      %vm240 = vcmp.le.f32.partialorder %v202, %v237
      %vm241 = vcmp.le.f32.partialorder %v203, %v237
      %vm242 = vcmp.le.f32.partialorder %v204, %v237
      %vm243 = vcmp.le.f32.partialorder %v205, %v237
      %vm244 = vcmp.le.f32.partialorder %v206, %v237
      %vm245 = vcmp.le.f32.partialorder %v207, %v237
      %vm246 = vcmp.le.f32.partialorder %v208, %v237
      %vm247 = vmand %vm228, %vm239
      %vm248 = vmand %vm229, %vm240
      %vm249 = vmand %vm230, %vm241
      %vm250 = vmand %vm231, %vm242
      %vm251 = vmand %vm232, %vm243
      %vm252 = vmand %vm233, %vm244
      %vm253 = vmand %vm234, %vm245
      %vm254 = vmand %vm235, %vm246
      %v255 = vsel %vm247, 1, 0
      %v256 = vsel %vm248, 1, 0
      %v257 = vsel %vm249, 1, 0
      %v258 = vsel %vm250, 1, 0
      %v259 = vsel %vm251, 1, 0
      %v260 = vsel %vm252, 1, 0
      %v261 = vsel %vm253, 1, 0
      %v262 = vsel %vm254, 1, 0
      %v263 = vcvt.s32.f32 %v255
      %v264 = vcvt.s32.f32 %v256
      %v265 = vcvt.s32.f32 %v257
      %v266 = vcvt.s32.f32 %v258
      %v267 = vcvt.s32.f32 %v259
      %v268 = vcvt.s32.f32 %v260
      %v269 = vcvt.s32.f32 %v261
      %v270 = vcvt.s32.f32 %v262
      %v271 = vld [vmem:[%s3] sm:$0xff]
      %v272 = vld [vmem:[%s3 + $0x8] sm:$0xf]
      %v274 = vperm.slane %v210, 0
      %vm276 = vcmp.ge.f32.partialorder %v201, %v274
      %vm277 = vcmp.ge.f32.partialorder %v202, %v274
      %vm278 = vcmp.ge.f32.partialorder %v203, %v274
      %vm279 = vcmp.ge.f32.partialorder %v204, %v274
      %vm280 = vcmp.ge.f32.partialorder %v205, %v274
      %vm281 = vcmp.ge.f32.partialorder %v206, %v274
      %vm282 = vcmp.ge.f32.partialorder %v207, %v274
      %vm283 = vcmp.ge.f32.partialorder %v208, %v274
      %v285 = vperm.slane %v218, 0
      %vm287 = vcmp.le.f32.partialorder %v201, %v285
      %vm288 = vcmp.le.f32.partialorder %v202, %v285
      %vm289 = vcmp.le.f32.partialorder %v203, %v285
      %vm290 = vcmp.le.f32.partialorder %v204, %v285
      %vm291 = vcmp.le.f32.partialorder %v205, %v285
      %vm292 = vcmp.le.f32.partialorder %v206, %v285
      %vm293 = vcmp.le.f32.partialorder %v207, %v285
      %vm294 = vcmp.le.f32.partialorder %v208, %v285
      %vm295 = vmand %vm276, %vm287
      %vm296 = vmand %vm277, %vm288
      %vm297 = vmand %vm278, %vm289
      %vm298 = vmand %vm279, %vm290
      %vm299 = vmand %vm280, %vm291
      %vm300 = vmand %vm281, %vm292
      %vm301 = vmand %vm282, %vm293
      %vm302 = vmand %vm283, %vm294
      %v303 = vsel %vm295, 1, 0
      %v304 = vsel %vm296, 1, 0
      %v305 = vsel %vm297, 1, 0
      %v306 = vsel %vm298, 1, 0
      %v307 = vsel %vm299, 1, 0
      %v308 = vsel %vm300, 1, 0
      %v309 = vsel %vm301, 1, 0
      %v310 = vsel %vm302, 1, 0
      %v311 = vcvt.s32.f32 %v303
      %v312 = vcvt.s32.f32 %v304
      %v313 = vcvt.s32.f32 %v305
      %v314 = vcvt.s32.f32 %v306
      %v315 = vcvt.s32.f32 %v307
      %v316 = vcvt.s32.f32 %v308
      %v317 = vcvt.s32.f32 %v309
      %v318 = vcvt.s32.f32 %v310
      %s319 = scalar_lea.vmem %s3, 16
      %v320 = vld [vmem:[%s319] sm:$0xff]
      %v321 = vld [vmem:[%s319 + $0x8] sm:$0xf]
      %vm322 = vcmask 97280
      %v324 = vsel %vm322, %v311, 0
      %v327 = vsel %vm322, %v312, 0
      %v330 = vsel %vm322, %v313, 0
      %v333 = vsel %vm322, %v314, 0
      %v336 = vsel %vm322, %v315, 0
      %v339 = vsel %vm322, %v316, 0
      %v342 = vsel %vm322, %v317, 0
      %v345 = vsel %vm322, %v318, 0
      %vm347 = vcmask 1043456
      %v349 = vsel %vm347, %v321, 0
      %351 = vmatpush.msra.mxu0 0.0
      %352 = vmatpush.msra.mxu0 0.0
      %353 = vmatpush.msra.mxu0 0.0
      %354 = vmatpush.msra.mxu0 0.0
      %355 = vmatpush.msra.mxu0 0.0
      %356 = vmatpush.msra.mxu0 0.0
      %357 = vmatpush.msra.mxu0 0.0
      %358 = vmatpush.msra.mxu0 0.0
      %359 = vmatpush.msra.mxu0 0.0
      %360 = vmatpush.msra.mxu0 0.0
      %361 = vmatpush.msra.mxu0 0.0
      %362 = vmatpush.msra.mxu0 0.0
      %363 = vmatpush.msra.mxu0 0.0
      %364 = vmatpush.msra.mxu0 0.0
      %365 = vmatpush.msra.mxu0 %v349
      %366 = vmatpush.msra.mxu0 %v320
      %367 = vmatmul.f32.gmra.mxu0 %v324
      %v368 = vpop.f32.mrf.mxu0
      %v369 = vadd.f32 0.0, %v368
      %370 = vmatmul.f32.gmra.mxu0 %v327
      %v371 = vpop.f32.mrf.mxu0
      %v372 = vadd.f32 0.0, %v371
      %373 = vmatmul.f32.gmra.mxu0 %v330
      %v374 = vpop.f32.mrf.mxu0
      %v375 = vadd.f32 0.0, %v374
      %376 = vmatmul.f32.gmra.mxu0 %v333
      %v377 = vpop.f32.mrf.mxu0
      %v378 = vadd.f32 0.0, %v377
      %379 = vmatmul.f32.gmra.mxu0 %v336
      %v380 = vpop.f32.mrf.mxu0
      %v381 = vadd.f32 0.0, %v380
      %382 = vmatmul.f32.gmra.mxu0 %v339
      %v383 = vpop.f32.mrf.mxu0
      %v384 = vadd.f32 0.0, %v383
      %385 = vmatmul.f32.gmra.mxu0 %v342
      %v386 = vpop.f32.mrf.mxu0
      %v387 = vadd.f32 0.0, %v386
      %388 = vmatmul.f32.gmra.mxu0 %v345
      %v389 = vpop.f32.mrf.mxu0
      %v390 = vadd.f32 0.0, %v389
      %391 = vdwg.mxu0
      %v393 = vsel %vm322, %v263, 0
      %v396 = vsel %vm322, %v264, 0
      %v399 = vsel %vm322, %v265, 0
      %v402 = vsel %vm322, %v266, 0
      %v405 = vsel %vm322, %v267, 0
      %v408 = vsel %vm322, %v268, 0
      %v411 = vsel %vm322, %v269, 0
      %v414 = vsel %vm322, %v270, 0
      %v417 = vsel %vm347, %v272, 0
      %419 = vmatpush.msra.mxu0 0.0
      %420 = vmatpush.msra.mxu0 0.0
      %421 = vmatpush.msra.mxu0 0.0
      %422 = vmatpush.msra.mxu0 0.0
      %423 = vmatpush.msra.mxu0 0.0
      %424 = vmatpush.msra.mxu0 0.0
      %425 = vmatpush.msra.mxu0 0.0
      %426 = vmatpush.msra.mxu0 0.0
      %427 = vmatpush.msra.mxu0 0.0
      %428 = vmatpush.msra.mxu0 0.0
      %429 = vmatpush.msra.mxu0 0.0
      %430 = vmatpush.msra.mxu0 0.0
      %431 = vmatpush.msra.mxu0 0.0
      %432 = vmatpush.msra.mxu0 0.0
      %433 = vmatpush.msra.mxu0 %v417
      %434 = vmatpush.msra.mxu0 %v271
      %435 = vmatmul.f32.gmra.mxu0 %v393
      %v436 = vpop.f32.mrf.mxu0
      %v437 = vadd.f32 %v369, %v436
      %438 = vmatmul.f32.gmra.mxu0 %v396
      %v439 = vpop.f32.mrf.mxu0
      %v440 = vadd.f32 %v372, %v439
      %441 = vmatmul.f32.gmra.mxu0 %v399
      %v442 = vpop.f32.mrf.mxu0
      %v443 = vadd.f32 %v375, %v442
      %444 = vmatmul.f32.gmra.mxu0 %v402
      %v445 = vpop.f32.mrf.mxu0
      %v446 = vadd.f32 %v378, %v445
      %447 = vmatmul.f32.gmra.mxu0 %v405
      %v448 = vpop.f32.mrf.mxu0
      %v449 = vadd.f32 %v381, %v448
      %450 = vmatmul.f32.gmra.mxu0 %v408
      %v451 = vpop.f32.mrf.mxu0
      %v452 = vadd.f32 %v384, %v451
      %453 = vmatmul.f32.gmra.mxu0 %v411
      %v454 = vpop.f32.mrf.mxu0
      %v455 = vadd.f32 %v387, %v454
      %456 = vmatmul.f32.gmra.mxu0 %v414
      %v457 = vpop.f32.mrf.mxu0
      %v458 = vadd.f32 %v390, %v457
      %459 = vdwg.mxu0
      %v461 = vperm.slane %v211, 0
      %vm463 = vcmp.ge.f32.partialorder %v201, %v461
      %vm464 = vcmp.ge.f32.partialorder %v202, %v461
      %vm465 = vcmp.ge.f32.partialorder %v203, %v461
      %vm466 = vcmp.ge.f32.partialorder %v204, %v461
      %vm467 = vcmp.ge.f32.partialorder %v205, %v461
      %vm468 = vcmp.ge.f32.partialorder %v206, %v461
      %vm469 = vcmp.ge.f32.partialorder %v207, %v461
      %vm470 = vcmp.ge.f32.partialorder %v208, %v461
      %v472 = vperm.slane %v219, 0
      %vm474 = vcmp.le.f32.partialorder %v201, %v472
      %vm475 = vcmp.le.f32.partialorder %v202, %v472
      %vm476 = vcmp.le.f32.partialorder %v203, %v472
      %vm477 = vcmp.le.f32.partialorder %v204, %v472
      %vm478 = vcmp.le.f32.partialorder %v205, %v472
      %vm479 = vcmp.le.f32.partialorder %v206, %v472
      %vm480 = vcmp.le.f32.partialorder %v207, %v472
      %vm481 = vcmp.le.f32.partialorder %v208, %v472
      %vm482 = vmand %vm463, %vm474
      %vm483 = vmand %vm464, %vm475
      %vm484 = vmand %vm465, %vm476
      %vm485 = vmand %vm466, %vm477
      %vm486 = vmand %vm467, %vm478
      %vm487 = vmand %vm468, %vm479
      %vm488 = vmand %vm469, %vm480
      %vm489 = vmand %vm470, %vm481
      %v490 = vsel %vm482, 1, 0
      %v491 = vsel %vm483, 1, 0
      %v492 = vsel %vm484, 1, 0
      %v493 = vsel %vm485, 1, 0
      %v494 = vsel %vm486, 1, 0
      %v495 = vsel %vm487, 1, 0
      %v496 = vsel %vm488, 1, 0
      %v497 = vsel %vm489, 1, 0
      %v498 = vcvt.s32.f32 %v490
      %v499 = vcvt.s32.f32 %v491
      %v500 = vcvt.s32.f32 %v492
      %v501 = vcvt.s32.f32 %v493
      %v502 = vcvt.s32.f32 %v494
      %v503 = vcvt.s32.f32 %v495
      %v504 = vcvt.s32.f32 %v496
      %v505 = vcvt.s32.f32 %v497
      %s506 = scalar_lea.vmem %s3, 32
      %v507 = vld [vmem:[%s506] sm:$0xff]
      %v508 = vld [vmem:[%s506 + $0x8] sm:$0xf]
      %v510 = vsel %vm322, %v498, 0
      %v513 = vsel %vm322, %v499, 0
      %v516 = vsel %vm322, %v500, 0
      %v519 = vsel %vm322, %v501, 0
      %v522 = vsel %vm322, %v502, 0
      %v525 = vsel %vm322, %v503, 0
      %v528 = vsel %vm322, %v504, 0
      %v531 = vsel %vm322, %v505, 0
      %v534 = vsel %vm347, %v508, 0
      %536 = vmatpush.msra.mxu0 0.0
      %537 = vmatpush.msra.mxu0 0.0
      %538 = vmatpush.msra.mxu0 0.0
      %539 = vmatpush.msra.mxu0 0.0
      %540 = vmatpush.msra.mxu0 0.0
      %541 = vmatpush.msra.mxu0 0.0
      %542 = vmatpush.msra.mxu0 0.0
      %543 = vmatpush.msra.mxu0 0.0
      %544 = vmatpush.msra.mxu0 0.0
      %545 = vmatpush.msra.mxu0 0.0
      %546 = vmatpush.msra.mxu0 0.0
      %547 = vmatpush.msra.mxu0 0.0
      %548 = vmatpush.msra.mxu0 0.0
      %549 = vmatpush.msra.mxu0 0.0
      %550 = vmatpush.msra.mxu0 %v534
      %551 = vmatpush.msra.mxu0 %v507
      %552 = vmatmul.f32.gmra.mxu0 %v510
      %v553 = vpop.f32.mrf.mxu0
      %v554 = vadd.f32 0.0, %v553
      %555 = vmatmul.f32.gmra.mxu0 %v513
      %v556 = vpop.f32.mrf.mxu0
      %v557 = vadd.f32 0.0, %v556
      %558 = vmatmul.f32.gmra.mxu0 %v516
      %v559 = vpop.f32.mrf.mxu0
      %v560 = vadd.f32 0.0, %v559
      %561 = vmatmul.f32.gmra.mxu0 %v519
      %v562 = vpop.f32.mrf.mxu0
      %v563 = vadd.f32 0.0, %v562
      %564 = vmatmul.f32.gmra.mxu0 %v522
      %v565 = vpop.f32.mrf.mxu0
      %v566 = vadd.f32 0.0, %v565
      %567 = vmatmul.f32.gmra.mxu0 %v525
      %v568 = vpop.f32.mrf.mxu0
      %v569 = vadd.f32 0.0, %v568
      %570 = vmatmul.f32.gmra.mxu0 %v528
      %v571 = vpop.f32.mrf.mxu0
      %v572 = vadd.f32 0.0, %v571
      %573 = vmatmul.f32.gmra.mxu0 %v531
      %v574 = vpop.f32.mrf.mxu0
      %v575 = vadd.f32 0.0, %v574
      %576 = vdwg.mxu0
      %v577 = vadd.f32 %v437, %v554
      %v578 = vadd.f32 %v440, %v557
      %v579 = vadd.f32 %v443, %v560
      %v580 = vadd.f32 %v446, %v563
      %v581 = vadd.f32 %v449, %v566
      %v582 = vadd.f32 %v452, %v569
      %v583 = vadd.f32 %v455, %v572
      %v584 = vadd.f32 %v458, %v575
      %v586 = vperm.slane %v212, 0
      %vm588 = vcmp.ge.f32.partialorder %v201, %v586
      %vm589 = vcmp.ge.f32.partialorder %v202, %v586
      %vm590 = vcmp.ge.f32.partialorder %v203, %v586
      %vm591 = vcmp.ge.f32.partialorder %v204, %v586
      %vm592 = vcmp.ge.f32.partialorder %v205, %v586
      %vm593 = vcmp.ge.f32.partialorder %v206, %v586
      %vm594 = vcmp.ge.f32.partialorder %v207, %v586
      %vm595 = vcmp.ge.f32.partialorder %v208, %v586
      %v597 = vperm.slane %v220, 0
      %vm599 = vcmp.le.f32.partialorder %v201, %v597
      %vm600 = vcmp.le.f32.partialorder %v202, %v597
      %vm601 = vcmp.le.f32.partialorder %v203, %v597
      %vm602 = vcmp.le.f32.partialorder %v204, %v597
      %vm603 = vcmp.le.f32.partialorder %v205, %v597
      %vm604 = vcmp.le.f32.partialorder %v206, %v597
      %vm605 = vcmp.le.f32.partialorder %v207, %v597
      %vm606 = vcmp.le.f32.partialorder %v208, %v597
      %vm607 = vmand %vm588, %vm599
      %vm608 = vmand %vm589, %vm600
      %vm609 = vmand %vm590, %vm601
      %vm610 = vmand %vm591, %vm602
      %vm611 = vmand %vm592, %vm603
      %vm612 = vmand %vm593, %vm604
      %vm613 = vmand %vm594, %vm605
      %vm614 = vmand %vm595, %vm606
      %v615 = vsel %vm607, 1, 0
      %v616 = vsel %vm608, 1, 0
      %v617 = vsel %vm609, 1, 0
      %v618 = vsel %vm610, 1, 0
      %v619 = vsel %vm611, 1, 0
      %v620 = vsel %vm612, 1, 0
      %v621 = vsel %vm613, 1, 0
      %v622 = vsel %vm614, 1, 0
      %v623 = vcvt.s32.f32 %v615
      %v624 = vcvt.s32.f32 %v616
      %v625 = vcvt.s32.f32 %v617
      %v626 = vcvt.s32.f32 %v618
      %v627 = vcvt.s32.f32 %v619
      %v628 = vcvt.s32.f32 %v620
      %v629 = vcvt.s32.f32 %v621
      %v630 = vcvt.s32.f32 %v622
      %s631 = scalar_lea.vmem %s3, 48
      %v632 = vld [vmem:[%s631] sm:$0xff]
      %v633 = vld [vmem:[%s631 + $0x8] sm:$0xf]
      %v635 = vsel %vm322, %v623, 0
      %v638 = vsel %vm322, %v624, 0
      %v641 = vsel %vm322, %v625, 0
      %v644 = vsel %vm322, %v626, 0
      %v647 = vsel %vm322, %v627, 0
      %v650 = vsel %vm322, %v628, 0
      %v653 = vsel %vm322, %v629, 0
      %v656 = vsel %vm322, %v630, 0
      %v659 = vsel %vm347, %v633, 0
      %661 = vmatpush.msra.mxu0 0.0
      %662 = vmatpush.msra.mxu0 0.0
      %663 = vmatpush.msra.mxu0 0.0
      %664 = vmatpush.msra.mxu0 0.0
      %665 = vmatpush.msra.mxu0 0.0
      %666 = vmatpush.msra.mxu0 0.0
      %667 = vmatpush.msra.mxu0 0.0
      %668 = vmatpush.msra.mxu0 0.0
      %669 = vmatpush.msra.mxu0 0.0
      %670 = vmatpush.msra.mxu0 0.0
      %671 = vmatpush.msra.mxu0 0.0
      %672 = vmatpush.msra.mxu0 0.0
      %673 = vmatpush.msra.mxu0 0.0
      %674 = vmatpush.msra.mxu0 0.0
      %675 = vmatpush.msra.mxu0 %v659
      %676 = vmatpush.msra.mxu0 %v632
      %677 = vmatmul.f32.gmra.mxu0 %v635
      %v678 = vpop.f32.mrf.mxu0
      %v679 = vadd.f32 0.0, %v678
      %680 = vmatmul.f32.gmra.mxu0 %v638
      %v681 = vpop.f32.mrf.mxu0
      %v682 = vadd.f32 0.0, %v681
      %683 = vmatmul.f32.gmra.mxu0 %v641
      %v684 = vpop.f32.mrf.mxu0
      %v685 = vadd.f32 0.0, %v684
      %686 = vmatmul.f32.gmra.mxu0 %v644
      %v687 = vpop.f32.mrf.mxu0
      %v688 = vadd.f32 0.0, %v687
      %689 = vmatmul.f32.gmra.mxu0 %v647
      %v690 = vpop.f32.mrf.mxu0
      %v691 = vadd.f32 0.0, %v690
      %692 = vmatmul.f32.gmra.mxu0 %v650
      %v693 = vpop.f32.mrf.mxu0
      %v694 = vadd.f32 0.0, %v693
      %695 = vmatmul.f32.gmra.mxu0 %v653
      %v696 = vpop.f32.mrf.mxu0
      %v697 = vadd.f32 0.0, %v696
      %698 = vmatmul.f32.gmra.mxu0 %v656
      %v699 = vpop.f32.mrf.mxu0
      %v700 = vadd.f32 0.0, %v699
      %701 = vdwg.mxu0
      %v702 = vadd.f32 %v577, %v679
      %v703 = vadd.f32 %v578, %v682
      %v704 = vadd.f32 %v579, %v685
      %v705 = vadd.f32 %v580, %v688
      %v706 = vadd.f32 %v581, %v691
      %v707 = vadd.f32 %v582, %v694
      %v708 = vadd.f32 %v583, %v697
      %v709 = vadd.f32 %v584, %v700
      %v711 = vperm.slane %v213, 0
      %vm713 = vcmp.ge.f32.partialorder %v201, %v711
      %vm714 = vcmp.ge.f32.partialorder %v202, %v711
      %vm715 = vcmp.ge.f32.partialorder %v203, %v711
      %vm716 = vcmp.ge.f32.partialorder %v204, %v711
      %vm717 = vcmp.ge.f32.partialorder %v205, %v711
      %vm718 = vcmp.ge.f32.partialorder %v206, %v711
      %vm719 = vcmp.ge.f32.partialorder %v207, %v711
      %vm720 = vcmp.ge.f32.partialorder %v208, %v711
      %v722 = vperm.slane %v221, 0
      %vm724 = vcmp.le.f32.partialorder %v201, %v722
      %vm725 = vcmp.le.f32.partialorder %v202, %v722
      %vm726 = vcmp.le.f32.partialorder %v203, %v722
      %vm727 = vcmp.le.f32.partialorder %v204, %v722
      %vm728 = vcmp.le.f32.partialorder %v205, %v722
      %vm729 = vcmp.le.f32.partialorder %v206, %v722
      %vm730 = vcmp.le.f32.partialorder %v207, %v722
      %vm731 = vcmp.le.f32.partialorder %v208, %v722
      %vm732 = vmand %vm713, %vm724
      %vm733 = vmand %vm714, %vm725
      %vm734 = vmand %vm715, %vm726
      %vm735 = vmand %vm716, %vm727
      %vm736 = vmand %vm717, %vm728
      %vm737 = vmand %vm718, %vm729
      %vm738 = vmand %vm719, %vm730
      %vm739 = vmand %vm720, %vm731
      %v740 = vsel %vm732, 1, 0
      %v741 = vsel %vm733, 1, 0
      %v742 = vsel %vm734, 1, 0
      %v743 = vsel %vm735, 1, 0
      %v744 = vsel %vm736, 1, 0
      %v745 = vsel %vm737, 1, 0
      %v746 = vsel %vm738, 1, 0
      %v747 = vsel %vm739, 1, 0
      %v748 = vcvt.s32.f32 %v740
      %v749 = vcvt.s32.f32 %v741
      %v750 = vcvt.s32.f32 %v742
      %v751 = vcvt.s32.f32 %v743
      %v752 = vcvt.s32.f32 %v744
      %v753 = vcvt.s32.f32 %v745
      %v754 = vcvt.s32.f32 %v746
      %v755 = vcvt.s32.f32 %v747
      %s756 = scalar_lea.vmem %s3, 64
      %v757 = vld [vmem:[%s756] sm:$0xff]
      %v758 = vld [vmem:[%s756 + $0x8] sm:$0xf]
      %v760 = vsel %vm322, %v748, 0
      %v763 = vsel %vm322, %v749, 0
      %v766 = vsel %vm322, %v750, 0
      %v769 = vsel %vm322, %v751, 0
      %v772 = vsel %vm322, %v752, 0
      %v775 = vsel %vm322, %v753, 0
      %v778 = vsel %vm322, %v754, 0
      %v781 = vsel %vm322, %v755, 0
      %v784 = vsel %vm347, %v758, 0
      %786 = vmatpush.msra.mxu0 0.0
      %787 = vmatpush.msra.mxu0 0.0
      %788 = vmatpush.msra.mxu0 0.0
      %789 = vmatpush.msra.mxu0 0.0
      %790 = vmatpush.msra.mxu0 0.0
      %791 = vmatpush.msra.mxu0 0.0
      %792 = vmatpush.msra.mxu0 0.0
      %793 = vmatpush.msra.mxu0 0.0
      %794 = vmatpush.msra.mxu0 0.0
      %795 = vmatpush.msra.mxu0 0.0
      %796 = vmatpush.msra.mxu0 0.0
      %797 = vmatpush.msra.mxu0 0.0
      %798 = vmatpush.msra.mxu0 0.0
      %799 = vmatpush.msra.mxu0 0.0
      %800 = vmatpush.msra.mxu0 %v784
      %801 = vmatpush.msra.mxu0 %v757
      %802 = vmatmul.f32.gmra.mxu0 %v760
      %v803 = vpop.f32.mrf.mxu0
      %v804 = vadd.f32 0.0, %v803
      %805 = vmatmul.f32.gmra.mxu0 %v763
      %v806 = vpop.f32.mrf.mxu0
      %v807 = vadd.f32 0.0, %v806
      %808 = vmatmul.f32.gmra.mxu0 %v766
      %v809 = vpop.f32.mrf.mxu0
      %v810 = vadd.f32 0.0, %v809
      %811 = vmatmul.f32.gmra.mxu0 %v769
      %v812 = vpop.f32.mrf.mxu0
      %v813 = vadd.f32 0.0, %v812
      %814 = vmatmul.f32.gmra.mxu0 %v772
      %v815 = vpop.f32.mrf.mxu0
      %v816 = vadd.f32 0.0, %v815
      %817 = vmatmul.f32.gmra.mxu0 %v775
      %v818 = vpop.f32.mrf.mxu0
      %v819 = vadd.f32 0.0, %v818
      %820 = vmatmul.f32.gmra.mxu0 %v778
      %v821 = vpop.f32.mrf.mxu0
      %v822 = vadd.f32 0.0, %v821
      %823 = vmatmul.f32.gmra.mxu0 %v781
      %v824 = vpop.f32.mrf.mxu0
      %v825 = vadd.f32 0.0, %v824
      %826 = vdwg.mxu0
      %v827 = vadd.f32 %v702, %v804
      %v828 = vadd.f32 %v703, %v807
      %v829 = vadd.f32 %v704, %v810
      %v830 = vadd.f32 %v705, %v813
      %v831 = vadd.f32 %v706, %v816
      %v832 = vadd.f32 %v707, %v819
      %v833 = vadd.f32 %v708, %v822
      %v834 = vadd.f32 %v709, %v825
      %v836 = vperm.slane %v214, 0
      %vm838 = vcmp.ge.f32.partialorder %v201, %v836
      %vm839 = vcmp.ge.f32.partialorder %v202, %v836
      %vm840 = vcmp.ge.f32.partialorder %v203, %v836
      %vm841 = vcmp.ge.f32.partialorder %v204, %v836
      %vm842 = vcmp.ge.f32.partialorder %v205, %v836
      %vm843 = vcmp.ge.f32.partialorder %v206, %v836
      %vm844 = vcmp.ge.f32.partialorder %v207, %v836
      %vm845 = vcmp.ge.f32.partialorder %v208, %v836
      %v847 = vperm.slane %v222, 0
      %vm849 = vcmp.le.f32.partialorder %v201, %v847
      %vm850 = vcmp.le.f32.partialorder %v202, %v847
      %vm851 = vcmp.le.f32.partialorder %v203, %v847
      %vm852 = vcmp.le.f32.partialorder %v204, %v847
      %vm853 = vcmp.le.f32.partialorder %v205, %v847
      %vm854 = vcmp.le.f32.partialorder %v206, %v847
      %vm855 = vcmp.le.f32.partialorder %v207, %v847
      %vm856 = vcmp.le.f32.partialorder %v208, %v847
      %vm857 = vmand %vm838, %vm849
      %vm858 = vmand %vm839, %vm850
      %vm859 = vmand %vm840, %vm851
      %vm860 = vmand %vm841, %vm852
      %vm861 = vmand %vm842, %vm853
      %vm862 = vmand %vm843, %vm854
      %vm863 = vmand %vm844, %vm855
      %vm864 = vmand %vm845, %vm856
      %v865 = vsel %vm857, 1, 0
      %v866 = vsel %vm858, 1, 0
      %v867 = vsel %vm859, 1, 0
      %v868 = vsel %vm860, 1, 0
      %v869 = vsel %vm861, 1, 0
      %v870 = vsel %vm862, 1, 0
      %v871 = vsel %vm863, 1, 0
      %v872 = vsel %vm864, 1, 0
      %v873 = vcvt.s32.f32 %v865
      %v874 = vcvt.s32.f32 %v866
      %v875 = vcvt.s32.f32 %v867
      %v876 = vcvt.s32.f32 %v868
      %v877 = vcvt.s32.f32 %v869
      %v878 = vcvt.s32.f32 %v870
      %v879 = vcvt.s32.f32 %v871
      %v880 = vcvt.s32.f32 %v872
      %s881 = scalar_lea.vmem %s3, 80
      %v882 = vld [vmem:[%s881] sm:$0xff]
      %v883 = vld [vmem:[%s881 + $0x8] sm:$0xf]
      %v885 = vsel %vm322, %v873, 0
      %v888 = vsel %vm322, %v874, 0
      %v891 = vsel %vm322, %v875, 0
      %v894 = vsel %vm322, %v876, 0
      %v897 = vsel %vm322, %v877, 0
      %v900 = vsel %vm322, %v878, 0
      %v903 = vsel %vm322, %v879, 0
      %v906 = vsel %vm322, %v880, 0
      %v909 = vsel %vm347, %v883, 0
      %911 = vmatpush.msra.mxu0 0.0
      %912 = vmatpush.msra.mxu0 0.0
      %913 = vmatpush.msra.mxu0 0.0
      %914 = vmatpush.msra.mxu0 0.0
      %915 = vmatpush.msra.mxu0 0.0
      %916 = vmatpush.msra.mxu0 0.0
      %917 = vmatpush.msra.mxu0 0.0
      %918 = vmatpush.msra.mxu0 0.0
      %919 = vmatpush.msra.mxu0 0.0
      %920 = vmatpush.msra.mxu0 0.0
      %921 = vmatpush.msra.mxu0 0.0
      %922 = vmatpush.msra.mxu0 0.0
      %923 = vmatpush.msra.mxu0 0.0
      %924 = vmatpush.msra.mxu0 0.0
      %925 = vmatpush.msra.mxu0 %v909
      %926 = vmatpush.msra.mxu0 %v882
      %927 = vmatmul.f32.gmra.mxu0 %v885
      %v928 = vpop.f32.mrf.mxu0
      %v929 = vadd.f32 0.0, %v928
      %930 = vmatmul.f32.gmra.mxu0 %v888
      %v931 = vpop.f32.mrf.mxu0
      %v932 = vadd.f32 0.0, %v931
      %933 = vmatmul.f32.gmra.mxu0 %v891
      %v934 = vpop.f32.mrf.mxu0
      %v935 = vadd.f32 0.0, %v934
      %936 = vmatmul.f32.gmra.mxu0 %v894
      %v937 = vpop.f32.mrf.mxu0
      %v938 = vadd.f32 0.0, %v937
      %939 = vmatmul.f32.gmra.mxu0 %v897
      %v940 = vpop.f32.mrf.mxu0
      %v941 = vadd.f32 0.0, %v940
      %942 = vmatmul.f32.gmra.mxu0 %v900
      %v943 = vpop.f32.mrf.mxu0
      %v944 = vadd.f32 0.0, %v943
      %945 = vmatmul.f32.gmra.mxu0 %v903
      %v946 = vpop.f32.mrf.mxu0
      %v947 = vadd.f32 0.0, %v946
      %948 = vmatmul.f32.gmra.mxu0 %v906
      %v949 = vpop.f32.mrf.mxu0
      %v950 = vadd.f32 0.0, %v949
      %951 = vdwg.mxu0
      %v952 = vadd.f32 %v827, %v929
      %v953 = vadd.f32 %v828, %v932
      %v954 = vadd.f32 %v829, %v935
      %v955 = vadd.f32 %v830, %v938
      %v956 = vadd.f32 %v831, %v941
      %v957 = vadd.f32 %v832, %v944
      %v958 = vadd.f32 %v833, %v947
      %v959 = vadd.f32 %v834, %v950
      %v961 = vperm.slane %v215, 0
      %vm963 = vcmp.ge.f32.partialorder %v201, %v961
      %vm964 = vcmp.ge.f32.partialorder %v202, %v961
      %vm965 = vcmp.ge.f32.partialorder %v203, %v961
      %vm966 = vcmp.ge.f32.partialorder %v204, %v961
      %vm967 = vcmp.ge.f32.partialorder %v205, %v961
      %vm968 = vcmp.ge.f32.partialorder %v206, %v961
      %vm969 = vcmp.ge.f32.partialorder %v207, %v961
      %vm970 = vcmp.ge.f32.partialorder %v208, %v961
      %v972 = vperm.slane %v223, 0
      %vm974 = vcmp.le.f32.partialorder %v201, %v972
      %vm975 = vcmp.le.f32.partialorder %v202, %v972
      %vm976 = vcmp.le.f32.partialorder %v203, %v972
      %vm977 = vcmp.le.f32.partialorder %v204, %v972
      %vm978 = vcmp.le.f32.partialorder %v205, %v972
      %vm979 = vcmp.le.f32.partialorder %v206, %v972
      %vm980 = vcmp.le.f32.partialorder %v207, %v972
      %vm981 = vcmp.le.f32.partialorder %v208, %v972
      %vm982 = vmand %vm963, %vm974
      %vm983 = vmand %vm964, %vm975
      %vm984 = vmand %vm965, %vm976
      %vm985 = vmand %vm966, %vm977
      %vm986 = vmand %vm967, %vm978
      %vm987 = vmand %vm968, %vm979
      %vm988 = vmand %vm969, %vm980
      %vm989 = vmand %vm970, %vm981
      %v990 = vsel %vm982, 1, 0
      %v991 = vsel %vm983, 1, 0
      %v992 = vsel %vm984, 1, 0
      %v993 = vsel %vm985, 1, 0
      %v994 = vsel %vm986, 1, 0
      %v995 = vsel %vm987, 1, 0
      %v996 = vsel %vm988, 1, 0
      %v997 = vsel %vm989, 1, 0
      %v998 = vcvt.s32.f32 %v990
      %v999 = vcvt.s32.f32 %v991
      %v1000 = vcvt.s32.f32 %v992
      %v1001 = vcvt.s32.f32 %v993
      %v1002 = vcvt.s32.f32 %v994
      %v1003 = vcvt.s32.f32 %v995
      %v1004 = vcvt.s32.f32 %v996
      %v1005 = vcvt.s32.f32 %v997
      %s1006 = scalar_lea.vmem %s3, 96
      %v1007 = vld [vmem:[%s1006] sm:$0xff]
      %v1008 = vld [vmem:[%s1006 + $0x8] sm:$0xf]
      %v1010 = vsel %vm322, %v998, 0
      %v1013 = vsel %vm322, %v999, 0
      %v1016 = vsel %vm322, %v1000, 0
      %v1019 = vsel %vm322, %v1001, 0
      %v1022 = vsel %vm322, %v1002, 0
      %v1025 = vsel %vm322, %v1003, 0
      %v1028 = vsel %vm322, %v1004, 0
      %v1031 = vsel %vm322, %v1005, 0
      %v1034 = vsel %vm347, %v1008, 0
      %1036 = vmatpush.msra.mxu0 0.0
      %1037 = vmatpush.msra.mxu0 0.0
      %1038 = vmatpush.msra.mxu0 0.0
      %1039 = vmatpush.msra.mxu0 0.0
      %1040 = vmatpush.msra.mxu0 0.0
      %1041 = vmatpush.msra.mxu0 0.0
      %1042 = vmatpush.msra.mxu0 0.0
      %1043 = vmatpush.msra.mxu0 0.0
      %1044 = vmatpush.msra.mxu0 0.0
      %1045 = vmatpush.msra.mxu0 0.0
      %1046 = vmatpush.msra.mxu0 0.0
      %1047 = vmatpush.msra.mxu0 0.0
      %1048 = vmatpush.msra.mxu0 0.0
      %1049 = vmatpush.msra.mxu0 0.0
      %1050 = vmatpush.msra.mxu0 %v1034
      %1051 = vmatpush.msra.mxu0 %v1007
      %1052 = vmatmul.f32.gmra.mxu0 %v1010
      %v1053 = vpop.f32.mrf.mxu0
      %v1054 = vadd.f32 0.0, %v1053
      %1055 = vmatmul.f32.gmra.mxu0 %v1013
      %v1056 = vpop.f32.mrf.mxu0
      %v1057 = vadd.f32 0.0, %v1056
      %1058 = vmatmul.f32.gmra.mxu0 %v1016
      %v1059 = vpop.f32.mrf.mxu0
      %v1060 = vadd.f32 0.0, %v1059
      %1061 = vmatmul.f32.gmra.mxu0 %v1019
      %v1062 = vpop.f32.mrf.mxu0
      %v1063 = vadd.f32 0.0, %v1062
      %1064 = vmatmul.f32.gmra.mxu0 %v1022
      %v1065 = vpop.f32.mrf.mxu0
      %v1066 = vadd.f32 0.0, %v1065
      %1067 = vmatmul.f32.gmra.mxu0 %v1025
      %v1068 = vpop.f32.mrf.mxu0
      %v1069 = vadd.f32 0.0, %v1068
      %1070 = vmatmul.f32.gmra.mxu0 %v1028
      %v1071 = vpop.f32.mrf.mxu0
      %v1072 = vadd.f32 0.0, %v1071
      %1073 = vmatmul.f32.gmra.mxu0 %v1031
      %v1074 = vpop.f32.mrf.mxu0
      %v1075 = vadd.f32 0.0, %v1074
      %1076 = vdwg.mxu0
      %v1077 = vadd.f32 %v952, %v1054
      %v1078 = vadd.f32 %v953, %v1057
      %v1079 = vadd.f32 %v954, %v1060
      %v1080 = vadd.f32 %v955, %v1063
      %v1081 = vadd.f32 %v956, %v1066
      %v1082 = vadd.f32 %v957, %v1069
      %v1083 = vadd.f32 %v958, %v1072
      %v1084 = vadd.f32 %v959, %v1075
      %v1086 = vperm.slane %v216, 0
      %vm1088 = vcmp.ge.f32.partialorder %v201, %v1086
      %vm1089 = vcmp.ge.f32.partialorder %v202, %v1086
      %vm1090 = vcmp.ge.f32.partialorder %v203, %v1086
      %vm1091 = vcmp.ge.f32.partialorder %v204, %v1086
      %vm1092 = vcmp.ge.f32.partialorder %v205, %v1086
      %vm1093 = vcmp.ge.f32.partialorder %v206, %v1086
      %vm1094 = vcmp.ge.f32.partialorder %v207, %v1086
      %vm1095 = vcmp.ge.f32.partialorder %v208, %v1086
      %v1097 = vperm.slane %v224, 0
      %vm1099 = vcmp.le.f32.partialorder %v201, %v1097
      %vm1100 = vcmp.le.f32.partialorder %v202, %v1097
      %vm1101 = vcmp.le.f32.partialorder %v203, %v1097
      %vm1102 = vcmp.le.f32.partialorder %v204, %v1097
      %vm1103 = vcmp.le.f32.partialorder %v205, %v1097
      %vm1104 = vcmp.le.f32.partialorder %v206, %v1097
      %vm1105 = vcmp.le.f32.partialorder %v207, %v1097
      %vm1106 = vcmp.le.f32.partialorder %v208, %v1097
      %vm1107 = vmand %vm1088, %vm1099
      %vm1108 = vmand %vm1089, %vm1100
      %vm1109 = vmand %vm1090, %vm1101
      %vm1110 = vmand %vm1091, %vm1102
      %vm1111 = vmand %vm1092, %vm1103
      %vm1112 = vmand %vm1093, %vm1104
      %vm1113 = vmand %vm1094, %vm1105
      %vm1114 = vmand %vm1095, %vm1106
      %v1115 = vsel %vm1107, 1, 0
      %v1116 = vsel %vm1108, 1, 0
      %v1117 = vsel %vm1109, 1, 0
      %v1118 = vsel %vm1110, 1, 0
      %v1119 = vsel %vm1111, 1, 0
      %v1120 = vsel %vm1112, 1, 0
      %v1121 = vsel %vm1113, 1, 0
      %v1122 = vsel %vm1114, 1, 0
      %v1123 = vcvt.s32.f32 %v1115
      %v1124 = vcvt.s32.f32 %v1116
      %v1125 = vcvt.s32.f32 %v1117
      %v1126 = vcvt.s32.f32 %v1118
      %v1127 = vcvt.s32.f32 %v1119
      %v1128 = vcvt.s32.f32 %v1120
      %v1129 = vcvt.s32.f32 %v1121
      %v1130 = vcvt.s32.f32 %v1122
      %s1131 = scalar_lea.vmem %s3, 112
      %v1132 = vld [vmem:[%s1131] sm:$0xff]
      %v1133 = vld [vmem:[%s1131 + $0x8] sm:$0xf]
      %v1135 = vsel %vm322, %v1123, 0
      %v1138 = vsel %vm322, %v1124, 0
      %v1141 = vsel %vm322, %v1125, 0
      %v1144 = vsel %vm322, %v1126, 0
      %v1147 = vsel %vm322, %v1127, 0
      %v1150 = vsel %vm322, %v1128, 0
      %v1153 = vsel %vm322, %v1129, 0
      %v1156 = vsel %vm322, %v1130, 0
      %v1159 = vsel %vm347, %v1133, 0
      %1161 = vmatpush.msra.mxu0 0.0
      %1162 = vmatpush.msra.mxu0 0.0
      %1163 = vmatpush.msra.mxu0 0.0
      %1164 = vmatpush.msra.mxu0 0.0
      %1165 = vmatpush.msra.mxu0 0.0
      %1166 = vmatpush.msra.mxu0 0.0
      %1167 = vmatpush.msra.mxu0 0.0
      %1168 = vmatpush.msra.mxu0 0.0
      %1169 = vmatpush.msra.mxu0 0.0
      %1170 = vmatpush.msra.mxu0 0.0
      %1171 = vmatpush.msra.mxu0 0.0
      %1172 = vmatpush.msra.mxu0 0.0
      %1173 = vmatpush.msra.mxu0 0.0
      %1174 = vmatpush.msra.mxu0 0.0
      %1175 = vmatpush.msra.mxu0 %v1159
      %1176 = vmatpush.msra.mxu0 %v1132
      %1177 = vmatmul.f32.gmra.mxu0 %v1135
      %v1178 = vpop.f32.mrf.mxu0
      %v1179 = vadd.f32 0.0, %v1178
      %1180 = vmatmul.f32.gmra.mxu0 %v1138
      %v1181 = vpop.f32.mrf.mxu0
      %v1182 = vadd.f32 0.0, %v1181
      %1183 = vmatmul.f32.gmra.mxu0 %v1141
      %v1184 = vpop.f32.mrf.mxu0
      %v1185 = vadd.f32 0.0, %v1184
      %1186 = vmatmul.f32.gmra.mxu0 %v1144
      %v1187 = vpop.f32.mrf.mxu0
      %v1188 = vadd.f32 0.0, %v1187
      %1189 = vmatmul.f32.gmra.mxu0 %v1147
      %v1190 = vpop.f32.mrf.mxu0
      %v1191 = vadd.f32 0.0, %v1190
      %1192 = vmatmul.f32.gmra.mxu0 %v1150
      %v1193 = vpop.f32.mrf.mxu0
      %v1194 = vadd.f32 0.0, %v1193
      %1195 = vmatmul.f32.gmra.mxu0 %v1153
      %v1196 = vpop.f32.mrf.mxu0
      %v1197 = vadd.f32 0.0, %v1196
      %1198 = vmatmul.f32.gmra.mxu0 %v1156
      %v1199 = vpop.f32.mrf.mxu0
      %v1200 = vadd.f32 0.0, %v1199
      %1201 = vdwg.mxu0
      %v1202 = vadd.f32 %v1077, %v1179
      %v1203 = vadd.f32 %v1078, %v1182
      %v1204 = vadd.f32 %v1079, %v1185
      %v1205 = vadd.f32 %v1080, %v1188
      %v1206 = vadd.f32 %v1081, %v1191
      %v1207 = vadd.f32 %v1082, %v1194
      %v1208 = vadd.f32 %v1083, %v1197
      %v1209 = vadd.f32 %v1084, %v1200
      %vm1210 = vcmask 785408
      %1211 = vst.msk [vmem:[%s199] sm:$0xff] %vm1210, %v1202
      %1212 = vst.msk [vmem:[%s199 + $0x8] sm:$0xff] %vm1210, %v1203
      %1213 = vst.msk [vmem:[%s199 + $0x10] sm:$0xff] %vm1210, %v1204
      %1214 = vst.msk [vmem:[%s199 + $0x18] sm:$0xff] %vm1210, %v1205
      %1215 = vst.msk [vmem:[%s199 + $0x20] sm:$0xff] %vm1210, %v1206
      %1216 = vst.msk [vmem:[%s199 + $0x28] sm:$0xff] %vm1210, %v1207
      %1217 = vst.msk [vmem:[%s199 + $0x30] sm:$0xff] %vm1210, %v1208
      %1218 = vst.msk [vmem:[%s199 + $0x38] sm:$0xff] %vm1210, %v1209
      %s1219 = smul.u32 8, %s15
      %p1220 = scmp.lt.s32.totalorder %s1219, 31
      %s1221 = scalar_select %p1220, %s1219, 31
      %s1222 = smul.addr %s1221, 8
      %s1223 = scalar_lea.vmem %s4, %s1222
      // Predicated region
      $region37: #{tpu_custom_call.1} parent=35 // pred_check
        %p1224 = pneg %p122
      $region38: #{tpu_custom_call.1} parent=35 // pred_check_branch
        %1226 = sbr.rel (%p1224) target = $region40
      $region39: #{tpu_custom_call.1} parent=35 // pred_region
        %s1227 = smul.u32 8, %s15
      $region40: #{tpu_custom_call.1} parent=35 // pred_fallthru
        _
    $region36: #{tpu_custom_call.1} parent=5 // pred_fallthru
      _
    %p1228 = scmp.le.s32.totalorder 2, %s10
    // Predicated region
    $region41: #{tpu_custom_call.1} parent=5 // pred_check
      %p1229 = pneg %p1228
    $region42: #{tpu_custom_call.1} parent=5 // pred_check_branch
      %1231 = sbr.rel (%p1229) target = $region44
    $region43: #{tpu_custom_call.1} parent=5 // pred_region
      %s1232 = ssub.s32 %s10, 2
      // Predicated region
      $region45: #{tpu_custom_call.1} parent=43 // pred_check
        %p1233 = pneg %p128
      $region46: #{tpu_custom_call.1} parent=43 // pred_check_branch
        %1235 = sbr.rel (%p1233) target = $region48
      $region47: #{tpu_custom_call.1} parent=43 // pred_region
        %s1236 = smul.u32 8, %s16
        %p1237 = scmp.lt.s32.totalorder %s1236, 31
        %s1238 = scalar_select %p1237, %s1236, 31
        %s1239 = smul.addr %s1238, 8
        %s1240 = scalar_lea.vmem %s4, %s1239
      $region48: #{tpu_custom_call.1} parent=43 // pred_fallthru
        _
    $region44: #{tpu_custom_call.1} parent=5 // pred_fallthru
      _
  $region6: #{tpu_custom_call.1} parent=0 // loop_footer
    %s14 = sadd.s32 1, %s10
  $region7: #{tpu_custom_call.1} parent=0 // loop_footer_branch
    %9 = sbr.rel target = $region3
  $region8: #{tpu_custom_call.1} parent=0 // loop_exit
    _

</llo_original>
